<compile_context>
chip_gen: v7x
topology: tpu7x:2x2x1
jax: 0.10.0
libtpu: 0.0.40
codegen_flags: <defaults>
</compile_context>

<pallas_src>
from functools import partial

import jax
import jax.numpy as jnp
import numpy as np
from jax.experimental import pallas as pl
from jax.experimental.pallas import tpu as pltpu

# ----- Small, forward-consistent hyper-parameters -----
B = 2                      # batch
N = 16                     # number of graph nodes (atoms)
M_DIM = 8                  # node feature dim (atom types)
B_DIM = 4                  # bond types incl. the "no bond" channel
E = B_DIM - 1              # edge channels actually used: adj[..., 1:]
GRAPH_CONV_DIMS = [32, 16]
AUX_DIM = 32
MLP_DIMS = [32, 16]
OUT_W = 128                # lane-dense packed output: [ h (16 lanes) | logit (1 lane) | zeros ]
LANES = 128


# --------------------------------------------------------------------------
# Packed weight / bias slab layouts (single source of truth for wrapper + kernel)
# --------------------------------------------------------------------------
def _build_layouts():
    c0, c1 = GRAPH_CONV_DIMS
    w_shapes = {
        "w0":  (M_DIM,        (1 + E) * c0),   # fused [self | e0 | e1 | e2] layer 0
        "w1":  (c0 + M_DIM,   (1 + E) * c1),   # fused layer 1
        "wij": (c1 + M_DIM,   2 * AUX_DIM),    # fused [Wi | Wj] aggregation gate
        "wm0": (AUX_DIM,      MLP_DIMS[0]),
        "wm1": (MLP_DIMS[0],  MLP_DIMS[1]),
        "wpk": (MLP_DIMS[-1], OUT_W),          # [I | wo | 0] packing matmul
    }
    w_off, off = {}, 0
    for name, (r, c) in w_shapes.items():
        w_off[name] = (off, r, c)
        off += -(-r // 8) * 8                  # 8-aligned row offsets -> cheap static slices
    w_rows = off

    b_cols = {
        "b0":  (1 + E) * c0, "b1": (1 + E) * c1, "bij": 2 * AUX_DIM,
        "bm0": MLP_DIMS[0],  "bm1": MLP_DIMS[1], "bpk": OUT_W,
    }
    b_off = {name: (i, c) for i, (name, c) in enumerate(b_cols.items())}
    return w_off, w_rows, b_off, len(b_cols)


_W_OFF, _W_ROWS, _B_OFF, _B_ROWS = _build_layouts()


# --------------------------------------------------------------------------
# Kernel
# --------------------------------------------------------------------------
def _make_kernel(bb):
    """bb = batch items handled per kernel invocation (rows stacked along sublanes)."""
    c0, c1 = GRAPH_CONV_DIMS

    def kernel(adj_ref, node_ref, w_ref, b_ref, out_ref):
        def wblk(name):
            off, r, c = _W_OFF[name]
            return w_ref[off:off + r, :c]

        def bblk(name):
            row, c = _B_OFF[name]
            return b_ref[row:row + 1, :c]

        # torch.nan_to_num defaults: NaN -> 0, +/-inf -> +/- float32 max.
        adj = adj_ref[...]                                   # (bb*N, E*N) = [A_0 | A_1 | A_2]
        big = jnp.finfo(adj.dtype).max
        adj = jnp.clip(jnp.where(jnp.isnan(adj), 0.0, adj), -big, big)

        node = node_ref[...]                                 # (bb*N, M_DIM), batch rows stacked

        def gcn(ann, w_fused, b_fused, c):
            # Fused projection: columns = [self | msg_0 | ... | msg_{E-1}]  (lane-dense output).
            proj = jnp.dot(ann, w_fused, preferred_element_type=jnp.float32) + b_fused
            rows = []
            for b in range(bb):                              # bb <= 2, fully unrolled
                pb = proj[b * N:(b + 1) * N]                 # (N, (1+E)*c)
                ab = adj[b * N:(b + 1) * N]                  # (N, E*N)
                # [A_0|A_1|A_2] @ [M_0; M_1; M_2] -> single MXU op with K = E*N.
                msg = jnp.concatenate(
                    [pb[:, (1 + e) * c:(2 + e) * c] for e in range(E)], axis=0)
                rows.append(pb[:, :c] +
                            jnp.dot(ab, msg, preferred_element_type=jnp.float32))
            return jnp.tanh(jnp.concatenate(rows, axis=0))   # (bb*N, c)

        # --- GraphConvolution (two layers, annotations = concat(hidden, node)) ---
        h0 = gcn(node, wblk("w0"), bblk("b0"), c0)
        ann1 = jnp.concatenate([h0, node], axis=-1)
        h1 = gcn(ann1, wblk("w1"), bblk("b1"), c1)
        ann2 = jnp.concatenate([h1, node], axis=-1)          # (bb*N, c1 + M_DIM)

        # --- GraphAggregation: fused sigmoid/tanh gate, gated sum over nodes, tanh ---
        pij = (jnp.dot(ann2, wblk("wij"), preferred_element_type=jnp.float32)
               + bblk("bij"))                                # (bb*N, 2*AUX)
        gate = jax.nn.sigmoid(pij[:, :AUX_DIM]) * jnp.tanh(pij[:, AUX_DIM:])
        g = jnp.tanh(jnp.concatenate(
            [jnp.sum(gate[b * N:(b + 1) * N], axis=0, keepdims=True) for b in range(bb)],
            axis=0))                                         # (bb, AUX_DIM)

        # --- MultiDenseLayers (tanh after each dense) ---
        hd = jnp.tanh(jnp.dot(g, wblk("wm0"),
                              preferred_element_type=jnp.float32) + bblk("bm0"))
        hd = jnp.tanh(jnp.dot(hd, wblk("wm1"),
                              preferred_element_type=jnp.float32) + bblk("bm1"))

        # --- Packed lane-dense output: hd @ [I_16 | wo | 0] + [0 | bo | 0] ---
        # lanes [0:16] carry h, lane 16 carries the (activation=None) logit.
        packed = (jnp.dot(hd, wblk("wpk"), preferred_element_type=jnp.float32)
                  + bblk("bpk"))                             # (bb, OUT_W)
        out_ref[...] = packed[None]                          # (1, bb, OUT_W)

    return kernel


# --------------------------------------------------------------------------
# Wrapper
# --------------------------------------------------------------------------
def _batch_block():
    """Batch items per grid step: shard across the 2 TCs on v7x; collapse on single-TC chips."""
    try:
        kind = jax.devices()[0].device_kind.lower()
    except Exception:
        kind = ""
    if "v7" in kind or "7x" in kind:
        return 1          # grid=(B,) parallel -> one batch item per TensorCore
    return B              # v5e/v6e single TC: one invocation, no per-step pipeline overhead


def _fuse_params(p):
    """Wrapper-side layout plumbing: fuse per-layer weights and pack into two VMEM slabs."""
    mlp_last = MLP_DIMS[-1]

    w0 = jnp.concatenate([p["ws0"]] + [p["we0"][e] for e in range(E)], axis=-1)
    b0 = jnp.concatenate([p["bs0"]] + [p["be0"][e][None, :] for e in range(E)], axis=-1)
    w1 = jnp.concatenate([p["ws1"]] + [p["we1"][e] for e in range(E)], axis=-1)
    b1 = jnp.concatenate([p["bs1"]] + [p["be1"][e][None, :] for e in range(E)], axis=-1)
    wij = jnp.concatenate([p["wi"], p["wj"]], axis=-1)
    bij = jnp.concatenate([p["bi"], p["bj"]], axis=-1)

    # Packing matrix: [I_16 | wo | zeros] so one matmul emits the full 128-lane output row.
    w_pk = jnp.zeros((mlp_last, OUT_W), jnp.float32)
    w_pk = w_pk.at[:, :mlp_last].set(jnp.eye(mlp_last, dtype=jnp.float32))
    w_pk = w_pk.at[:, mlp_last:mlp_last + 1].set(p["wo"])
    b_pk = jnp.zeros((1, OUT_W), jnp.float32).at[0, mlp_last].set(p["bo"][0, 0])

    w_mats = {"w0": w0, "w1": w1, "wij": wij, "wm0": p["wm0"], "wm1": p["wm1"], "wpk": w_pk}
    b_vecs = {"b0": b0, "b1": b1, "bij": bij, "bm0": p["bm0"], "bm1": p["bm1"], "bpk": b_pk}

    wcat = jnp.zeros((_W_ROWS, LANES), jnp.float32)
    for name, (off, r, c) in _W_OFF.items():
        wcat = wcat.at[off:off + r, :c].set(w_mats[name])
    bcat = jnp.zeros((_B_ROWS, LANES), jnp.float32)
    for name, (row, c) in _B_OFF.items():
        bcat = bcat.at[row, :c].set(b_vecs[name].reshape(-1))
    return wcat, bcat


@partial(jax.jit, static_argnums=(3,))
def _forward_jit(adjacency_tensor, node, params, bb):
    mlp_last = MLP_DIMS[-1]
    grid = (B // bb,)

    # Layout plumbing in plain JAX (fused by XLA under jit):
    #   adj_cat[b*N + i, e*N + j] = adjacency[b, i, j, e+1]   ([A_0 | A_1 | A_2] along lanes),
    # batch rows stacked so the kernel sees plain 2-D row blocks.
    adj_cat = jnp.transpose(adjacency_tensor[:, :, :, 1:], (0, 1, 3, 2)).reshape(B * N, E * N)
    node_flat = node.reshape(B * N, M_DIM)
    wcat, bcat = _fuse_params(params)

    in_specs = [
        pl.BlockSpec((bb * N, E * N), lambda b: (b, 0)),
        pl.BlockSpec((bb * N, M_DIM), lambda b: (b, 0)),
        pl.BlockSpec((_W_ROWS, LANES), lambda b: (0, 0)),
        pl.BlockSpec((_B_ROWS, LANES), lambda b: (0, 0)),
    ]

    packed = pl.pallas_call(
        _make_kernel(bb),
        grid=grid,
        in_specs=in_specs,
        out_specs=pl.BlockSpec((1, bb, OUT_W), lambda b: (b, 0, 0)),
        out_shape=jax.ShapeDtypeStruct((B // bb, bb, OUT_W), jnp.float32),
        compiler_params=pltpu.CompilerParams(dimension_semantics=("parallel",)),
    )(adj_cat, node_flat, wcat, bcat)

    packed = packed.reshape(B, OUT_W)
    out = packed[:, mlp_last:mlp_last + 1]       # (B, 1) logit (activation=None)
    h = packed[:, :mlp_last]                     # (B, MLP_DIMS[-1])
    return out, h


def discriminator_forward(adjacency_tensor, node, params, batch_block=None):
    bb = _batch_block() if batch_block is None else batch_block
    assert B % bb == 0
    return _forward_jit(adjacency_tensor, node, params, bb)


# --------------------------------------------------------------------------
# Params / reference
# --------------------------------------------------------------------------
def init_params(key):
    c0, c1 = GRAPH_CONV_DIMS
    d0_in = M_DIM
    d1_in = c0 + M_DIM
    agg_in = c1 + M_DIM
    shapes = {
        "we0": (E, d0_in, c0),  "be0": (E, c0),
        "ws0": (d0_in, c0),     "bs0": (1, c0),
        "we1": (E, d1_in, c1),  "be1": (E, c1),
        "ws1": (d1_in, c1),     "bs1": (1, c1),
        "wi": (agg_in, AUX_DIM), "bi": (1, AUX_DIM),
        "wj": (agg_in, AUX_DIM), "bj": (1, AUX_DIM),
        "wm0": (AUX_DIM, MLP_DIMS[0]),     "bm0": (1, MLP_DIMS[0]),
        "wm1": (MLP_DIMS[0], MLP_DIMS[1]), "bm1": (1, MLP_DIMS[1]),
        "wo": (MLP_DIMS[1], 1), "bo": (1, 1),
    }
    params = {}
    keys = jax.random.split(key, len(shapes))
    for k_, (name, shp) in zip(keys, shapes.items()):
        params[name] = 0.1 * jax.random.normal(k_, shp, jnp.float32)
    return params


def reference_forward(adjacency_tensor, node, p):
    """Pure-JAX reference of the same forward pass (for validation, unfused params)."""
    adj = jnp.transpose(adjacency_tensor[:, :, :, 1:], (0, 3, 1, 2))
    adj = jnp.nan_to_num(adj)

    def gcn(ann, we, be, ws, bs):
        acc = jnp.einsum("bnd,du->bnu", ann, ws) + bs
        msgs = jnp.einsum("bnd,edu->benu", ann, we) + be[None, :, None, :]
        acc = acc + jnp.einsum("benm,bemu->bnu", adj, msgs)
        return jnp.tanh(acc)

    h0 = gcn(node, p["we0"], p["be0"], p["ws0"], p["bs0"])
    ann1 = jnp.concatenate([h0, node], -1)
    h1 = gcn(ann1, p["we1"], p["be1"], p["ws1"], p["bs1"])
    ann2 = jnp.concatenate([h1, node], -1)

    i_g = jax.nn.sigmoid(jnp.einsum("bnd,du->bnu", ann2, p["wi"]) + p["bi"])
    j_f = jnp.tanh(jnp.einsum("bnd,du->bnu", ann2, p["wj"]) + p["bj"])
    g = jnp.tanh(jnp.sum(i_g * j_f, axis=1))

    hd = jnp.tanh(g @ p["wm0"] + p["bm0"])
    hd = jnp.tanh(hd @ p["wm1"] + p["bm1"])
    out = hd @ p["wo"] + p["bo"]
    return out, hd


if __name__ == "__main__":
    key = jax.random.PRNGKey(0)
    k_adj, k_node, k_p = jax.random.split(key, 3)

    # adjacency: (B, N, N, B_DIM) soft one-hot over bond types; node: (B, N, M_DIM)
    adjacency_tensor = jax.nn.softmax(
        jax.random.normal(k_adj, (B, N, N, B_DIM), jnp.float32), axis=-1)
    node = jax.nn.softmax(
        jax.random.normal(k_node, (B, N, M_DIM), jnp.float32), axis=-1)
    params = init_params(k_p)

    out, h = discriminator_forward(adjacency_tensor, node, params)
    jax.block_until_ready((out, h))

    ref_out, ref_h = reference_forward(adjacency_tensor, node, params)
    np.testing.assert_allclose(np.asarray(out), np.asarray(ref_out), rtol=1e-5, atol=1e-5)
    np.testing.assert_allclose(np.asarray(h), np.asarray(ref_h), rtol=1e-5, atol=1e-5)

    print("KERNEL_OK")
</pallas_src>

<mosaic_0001>
module attributes {stable_mosaic.version = 11 : i64} {
  func.func @kernel(%arg0: i32, %arg1: memref<32x48xf32, #tpu.memory_space<vmem>>, %arg2: memref<32x8xf32, #tpu.memory_space<vmem>>, %arg3: memref<152x128xf32, #tpu.memory_space<vmem>>, %arg4: memref<6x128xf32, #tpu.memory_space<vmem>>, %arg5: memref<1x2x128xf32, #tpu.memory_space<vmem>>) attributes {dimension_semantics = [#tpu.dimension_semantics<parallel>], iteration_bounds = array<i64: 1>, scalar_prefetch = 0 : i64, scratch_operands = 0 : i64, tpu.core_type = #tpu.core_type<tc>, window_params = [{transform_indices = @transform_0, window_bounds = array<i64: 32, 48>}, {transform_indices = @transform_1, window_bounds = array<i64: 32, 8>}, {pipeline_mode = #tpu.pipeline_mode<synchronous>, transform_indices = @transform_2, window_bounds = array<i64: 152, 128>}, {pipeline_mode = #tpu.pipeline_mode<synchronous>, transform_indices = @transform_3, window_bounds = array<i64: 6, 128>}, {transform_indices = @transform_4, window_bounds = array<i64: 1, 2, 128>}]} {
    %c0 = arith.constant 0 : index
    %c0_0 = arith.constant 0 : index
    %0 = vector.load %arg1[%c0, %c0_0] : memref<32x48xf32, #tpu.memory_space<vmem>>, vector<32x48xf32>
    %1 = arith.cmpf one, %0, %0 : vector<32x48xf32>
    %cst = arith.constant 0.000000e+00 : f32
    %2 = vector.broadcast %cst : f32 to vector<32x48xf32>
    %3 = arith.select %1, %2, %0 : vector<32x48xi1>, vector<32x48xf32>
    %cst_1 = arith.constant -3.40282347E+38 : f32
    %cst_2 = arith.constant 3.40282347E+38 : f32
    %4 = vector.broadcast %cst_1 : f32 to vector<32x48xf32>
    %5 = arith.maximumf %4, %3 : vector<32x48xf32>
    %6 = vector.broadcast %cst_2 : f32 to vector<32x48xf32>
    %7 = arith.minimumf %6, %5 : vector<32x48xf32>
    %c0_3 = arith.constant 0 : index
    %c0_4 = arith.constant 0 : index
    %8 = vector.load %arg2[%c0_3, %c0_4] : memref<32x8xf32, #tpu.memory_space<vmem>>, vector<32x8xf32>
    %c0_5 = arith.constant 0 : index
    %c0_6 = arith.constant 0 : index
    %9 = vector.load %arg3[%c0_5, %c0_6] : memref<152x128xf32, #tpu.memory_space<vmem>>, vector<8x128xf32>
    %c0_7 = arith.constant 0 : index
    %c0_8 = arith.constant 0 : index
    %10 = vector.load %arg4[%c0_7, %c0_8] : memref<6x128xf32, #tpu.memory_space<vmem>>, vector<1x128xf32>
    %cst_9 = arith.constant dense<0.000000e+00> : vector<32x128xf32>
    %11 = tpu.matmul %8, %9, %cst_9 {dimension_numbers = #tpu.dot_dimension_numbers<[1], [0], [0], [1], [0, 0, 1, 1], [], []>} : vector<32x8xf32>, vector<8x128xf32>, vector<32x128xf32> -> vector<32x128xf32>
    %12 = vector.broadcast %10 : vector<1x128xf32> to vector<32x128xf32>
    %13 = arith.addf %11, %12 : vector<32x128xf32>
    %14 = vector.extract_strided_slice %13 {offsets = [0, 0], sizes = [16, 128], strides = [1, 1]} : vector<32x128xf32> to vector<16x128xf32>
    %15 = vector.extract_strided_slice %7 {offsets = [0, 0], sizes = [16, 48], strides = [1, 1]} : vector<32x48xf32> to vector<16x48xf32>
    %16 = vector.extract_strided_slice %14 {offsets = [0, 32], sizes = [16, 32], strides = [1, 1]} : vector<16x128xf32> to vector<16x32xf32>
    %17 = vector.extract_strided_slice %14 {offsets = [0, 64], sizes = [16, 32], strides = [1, 1]} : vector<16x128xf32> to vector<16x32xf32>
    %18 = vector.extract_strided_slice %14 {offsets = [0, 96], sizes = [16, 32], strides = [1, 1]} : vector<16x128xf32> to vector<16x32xf32>
    %19 = tpu.concatenate %16, %17, %18 in 0 : vector<16x32xf32>, vector<16x32xf32>, vector<16x32xf32> -> vector<48x32xf32>
    %20 = vector.extract_strided_slice %14 {offsets = [0, 0], sizes = [16, 32], strides = [1, 1]} : vector<16x128xf32> to vector<16x32xf32>
    %cst_10 = arith.constant dense<0.000000e+00> : vector<16x32xf32>
    %21 = tpu.matmul %15, %19, %cst_10 {dimension_numbers = #tpu.dot_dimension_numbers<[1], [0], [0], [1], [0, 0, 1, 1], [], []>} : vector<16x48xf32>, vector<48x32xf32>, vector<16x32xf32> -> vector<16x32xf32>
    %22 = arith.addf %20, %21 : vector<16x32xf32>
    %23 = vector.extract_strided_slice %13 {offsets = [16, 0], sizes = [16, 128], strides = [1, 1]} : vector<32x128xf32> to vector<16x128xf32>
    %24 = vector.extract_strided_slice %7 {offsets = [16, 0], sizes = [16, 48], strides = [1, 1]} : vector<32x48xf32> to vector<16x48xf32>
    %25 = vector.extract_strided_slice %23 {offsets = [0, 32], sizes = [16, 32], strides = [1, 1]} : vector<16x128xf32> to vector<16x32xf32>
    %26 = vector.extract_strided_slice %23 {offsets = [0, 64], sizes = [16, 32], strides = [1, 1]} : vector<16x128xf32> to vector<16x32xf32>
    %27 = vector.extract_strided_slice %23 {offsets = [0, 96], sizes = [16, 32], strides = [1, 1]} : vector<16x128xf32> to vector<16x32xf32>
    %28 = tpu.concatenate %25, %26, %27 in 0 : vector<16x32xf32>, vector<16x32xf32>, vector<16x32xf32> -> vector<48x32xf32>
    %29 = vector.extract_strided_slice %23 {offsets = [0, 0], sizes = [16, 32], strides = [1, 1]} : vector<16x128xf32> to vector<16x32xf32>
    %cst_11 = arith.constant dense<0.000000e+00> : vector<16x32xf32>
    %30 = tpu.matmul %24, %28, %cst_11 {dimension_numbers = #tpu.dot_dimension_numbers<[1], [0], [0], [1], [0, 0, 1, 1], [], []>} : vector<16x48xf32>, vector<48x32xf32>, vector<16x32xf32> -> vector<16x32xf32>
    %31 = arith.addf %29, %30 : vector<16x32xf32>
    %32 = tpu.concatenate %22, %31 in 0 : vector<16x32xf32>, vector<16x32xf32> -> vector<32x32xf32>
    %33 = math.tanh %32 : vector<32x32xf32>
    %34 = tpu.concatenate %33, %8 in 1 : vector<32x32xf32>, vector<32x8xf32> -> vector<32x40xf32>
    %c8 = arith.constant 8 : index
    %c0_12 = arith.constant 0 : index
    %35 = vector.load %arg3[%c8, %c0_12] : memref<152x128xf32, #tpu.memory_space<vmem>>, vector<40x64xf32>
    %c1 = arith.constant 1 : index
    %c0_13 = arith.constant 0 : index
    %36 = vector.load %arg4[%c1, %c0_13] : memref<6x128xf32, #tpu.memory_space<vmem>>, vector<1x64xf32>
    %cst_14 = arith.constant dense<0.000000e+00> : vector<32x64xf32>
    %37 = tpu.matmul %34, %35, %cst_14 {dimension_numbers = #tpu.dot_dimension_numbers<[1], [0], [0], [1], [0, 0, 1, 1], [], []>} : vector<32x40xf32>, vector<40x64xf32>, vector<32x64xf32> -> vector<32x64xf32>
    %38 = vector.broadcast %36 : vector<1x64xf32> to vector<32x64xf32>
    %39 = arith.addf %37, %38 : vector<32x64xf32>
    %40 = vector.extract_strided_slice %39 {offsets = [0, 0], sizes = [16, 64], strides = [1, 1]} : vector<32x64xf32> to vector<16x64xf32>
    %41 = vector.extract_strided_slice %7 {offsets = [0, 0], sizes = [16, 48], strides = [1, 1]} : vector<32x48xf32> to vector<16x48xf32>
    %42 = vector.extract_strided_slice %40 {offsets = [0, 16], sizes = [16, 16], strides = [1, 1]} : vector<16x64xf32> to vector<16x16xf32>
    %43 = vector.extract_strided_slice %40 {offsets = [0, 32], sizes = [16, 16], strides = [1, 1]} : vector<16x64xf32> to vector<16x16xf32>
    %44 = vector.extract_strided_slice %40 {offsets = [0, 48], sizes = [16, 16], strides = [1, 1]} : vector<16x64xf32> to vector<16x16xf32>
    %45 = tpu.concatenate %42, %43, %44 in 0 : vector<16x16xf32>, vector<16x16xf32>, vector<16x16xf32> -> vector<48x16xf32>
    %46 = vector.extract_strided_slice %40 {offsets = [0, 0], sizes = [16, 16], strides = [1, 1]} : vector<16x64xf32> to vector<16x16xf32>
    %cst_15 = arith.constant dense<0.000000e+00> : vector<16x16xf32>
    %47 = tpu.matmul %41, %45, %cst_15 {dimension_numbers = #tpu.dot_dimension_numbers<[1], [0], [0], [1], [0, 0, 1, 1], [], []>} : vector<16x48xf32>, vector<48x16xf32>, vector<16x16xf32> -> vector<16x16xf32>
    %48 = arith.addf %46, %47 : vector<16x16xf32>
    %49 = vector.extract_strided_slice %39 {offsets = [16, 0], sizes = [16, 64], strides = [1, 1]} : vector<32x64xf32> to vector<16x64xf32>
    %50 = vector.extract_strided_slice %7 {offsets = [16, 0], sizes = [16, 48], strides = [1, 1]} : vector<32x48xf32> to vector<16x48xf32>
    %51 = vector.extract_strided_slice %49 {offsets = [0, 16], sizes = [16, 16], strides = [1, 1]} : vector<16x64xf32> to vector<16x16xf32>
    %52 = vector.extract_strided_slice %49 {offsets = [0, 32], sizes = [16, 16], strides = [1, 1]} : vector<16x64xf32> to vector<16x16xf32>
    %53 = vector.extract_strided_slice %49 {offsets = [0, 48], sizes = [16, 16], strides = [1, 1]} : vector<16x64xf32> to vector<16x16xf32>
    %54 = tpu.concatenate %51, %52, %53 in 0 : vector<16x16xf32>, vector<16x16xf32>, vector<16x16xf32> -> vector<48x16xf32>
    %55 = vector.extract_strided_slice %49 {offsets = [0, 0], sizes = [16, 16], strides = [1, 1]} : vector<16x64xf32> to vector<16x16xf32>
    %cst_16 = arith.constant dense<0.000000e+00> : vector<16x16xf32>
    %56 = tpu.matmul %50, %54, %cst_16 {dimension_numbers = #tpu.dot_dimension_numbers<[1], [0], [0], [1], [0, 0, 1, 1], [], []>} : vector<16x48xf32>, vector<48x16xf32>, vector<16x16xf32> -> vector<16x16xf32>
    %57 = arith.addf %55, %56 : vector<16x16xf32>
    %58 = tpu.concatenate %48, %57 in 0 : vector<16x16xf32>, vector<16x16xf32> -> vector<32x16xf32>
    %59 = math.tanh %58 : vector<32x16xf32>
    %60 = tpu.concatenate %59, %8 in 1 : vector<32x16xf32>, vector<32x8xf32> -> vector<32x24xf32>
    %c48 = arith.constant 48 : index
    %c0_17 = arith.constant 0 : index
    %61 = vector.load %arg3[%c48, %c0_17] : memref<152x128xf32, #tpu.memory_space<vmem>>, vector<24x64xf32>
    %cst_18 = arith.constant dense<0.000000e+00> : vector<32x64xf32>
    %62 = tpu.matmul %60, %61, %cst_18 {dimension_numbers = #tpu.dot_dimension_numbers<[1], [0], [0], [1], [0, 0, 1, 1], [], []>} : vector<32x24xf32>, vector<24x64xf32>, vector<32x64xf32> -> vector<32x64xf32>
    %c2 = arith.constant 2 : index
    %c0_19 = arith.constant 0 : index
    %63 = vector.load %arg4[%c2, %c0_19] : memref<6x128xf32, #tpu.memory_space<vmem>>, vector<1x64xf32>
    %64 = vector.broadcast %63 : vector<1x64xf32> to vector<32x64xf32>
    %65 = arith.addf %62, %64 : vector<32x64xf32>
    %66 = vector.extract_strided_slice %65 {offsets = [0, 0], sizes = [32, 32], strides = [1, 1]} : vector<32x64xf32> to vector<32x32xf32>
    %67 = arith.negf %66 : vector<32x32xf32>
    %68 = math.exp %67 : vector<32x32xf32>
    %cst_20 = arith.constant 1.000000e+00 : f32
    %69 = vector.broadcast %cst_20 : f32 to vector<32x32xf32>
    %70 = arith.addf %69, %68 : vector<32x32xf32>
    %71 = arith.divf %69, %70 : vector<32x32xf32>
    %72 = vector.extract_strided_slice %65 {offsets = [0, 32], sizes = [32, 32], strides = [1, 1]} : vector<32x64xf32> to vector<32x32xf32>
    %73 = math.tanh %72 : vector<32x32xf32>
    %74 = arith.mulf %71, %73 : vector<32x32xf32>
    %75 = vector.extract_strided_slice %74 {offsets = [0, 0], sizes = [16, 32], strides = [1, 1]} : vector<32x32xf32> to vector<16x32xf32>
    %cst_21 = arith.constant dense<0.000000e+00> : vector<32xf32>
    %76 = vector.multi_reduction <add>, %75, %cst_21 [0] : vector<16x32xf32> to vector<32xf32>
    %77 = vector.shape_cast %76 : vector<32xf32> to vector<1x32xf32>
    %78 = vector.extract_strided_slice %74 {offsets = [16, 0], sizes = [16, 32], strides = [1, 1]} : vector<32x32xf32> to vector<16x32xf32>
    %cst_22 = arith.constant dense<0.000000e+00> : vector<32xf32>
    %79 = vector.multi_reduction <add>, %78, %cst_22 [0] : vector<16x32xf32> to vector<32xf32>
    %80 = vector.shape_cast %79 : vector<32xf32> to vector<1x32xf32>
    %81 = tpu.concatenate %77, %80 in 0 : vector<1x32xf32>, vector<1x32xf32> -> vector<2x32xf32>
    %82 = math.tanh %81 : vector<2x32xf32>
    %c72 = arith.constant 72 : index
    %c0_23 = arith.constant 0 : index
    %83 = vector.load %arg3[%c72, %c0_23] : memref<152x128xf32, #tpu.memory_space<vmem>>, vector<32x32xf32>
    %cst_24 = arith.constant dense<0.000000e+00> : vector<2x32xf32>
    %84 = tpu.matmul %82, %83, %cst_24 {dimension_numbers = #tpu.dot_dimension_numbers<[1], [0], [0], [1], [0, 0, 1, 1], [], []>} : vector<2x32xf32>, vector<32x32xf32>, vector<2x32xf32> -> vector<2x32xf32>
    %c3 = arith.constant 3 : index
    %c0_25 = arith.constant 0 : index
    %85 = vector.load %arg4[%c3, %c0_25] : memref<6x128xf32, #tpu.memory_space<vmem>>, vector<1x32xf32>
    %86 = vector.broadcast %85 : vector<1x32xf32> to vector<2x32xf32>
    %87 = arith.addf %84, %86 : vector<2x32xf32>
    %88 = math.tanh %87 : vector<2x32xf32>
    %c104 = arith.constant 104 : index
    %c0_26 = arith.constant 0 : index
    %89 = vector.load %arg3[%c104, %c0_26] : memref<152x128xf32, #tpu.memory_space<vmem>>, vector<32x16xf32>
    %cst_27 = arith.constant dense<0.000000e+00> : vector<2x16xf32>
    %90 = tpu.matmul %88, %89, %cst_27 {dimension_numbers = #tpu.dot_dimension_numbers<[1], [0], [0], [1], [0, 0, 1, 1], [], []>} : vector<2x32xf32>, vector<32x16xf32>, vector<2x16xf32> -> vector<2x16xf32>
    %c4 = arith.constant 4 : index
    %c0_28 = arith.constant 0 : index
    %91 = vector.load %arg4[%c4, %c0_28] : memref<6x128xf32, #tpu.memory_space<vmem>>, vector<1x16xf32>
    %92 = vector.broadcast %91 : vector<1x16xf32> to vector<2x16xf32>
    %93 = arith.addf %90, %92 : vector<2x16xf32>
    %94 = math.tanh %93 : vector<2x16xf32>
    %c136 = arith.constant 136 : index
    %c0_29 = arith.constant 0 : index
    %95 = vector.load %arg3[%c136, %c0_29] : memref<152x128xf32, #tpu.memory_space<vmem>>, vector<16x128xf32>
    %cst_30 = arith.constant dense<0.000000e+00> : vector<2x128xf32>
    %96 = tpu.matmul %94, %95, %cst_30 {dimension_numbers = #tpu.dot_dimension_numbers<[1], [0], [0], [1], [0, 0, 1, 1], [], []>} : vector<2x16xf32>, vector<16x128xf32>, vector<2x128xf32> -> vector<2x128xf32>
    %c5 = arith.constant 5 : index
    %c0_31 = arith.constant 0 : index
    %97 = vector.load %arg4[%c5, %c0_31] : memref<6x128xf32, #tpu.memory_space<vmem>>, vector<1x128xf32>
    %98 = vector.broadcast %97 : vector<1x128xf32> to vector<2x128xf32>
    %99 = arith.addf %96, %98 : vector<2x128xf32>
    %100 = vector.shape_cast %99 : vector<2x128xf32> to vector<1x2x128xf32>
    %c0_32 = arith.constant 0 : index
    %c0_33 = arith.constant 0 : index
    %c0_34 = arith.constant 0 : index
    %101 = vector.load %arg5[%c0_32, %c0_33, %c0_34] : memref<1x2x128xf32, #tpu.memory_space<vmem>>, vector<1x2x128xf32>
    tpu.vector_store %arg5[%c0_32, %c0_33, %c0_34], %100 {strides = array<i32>} : memref<1x2x128xf32, #tpu.memory_space<vmem>>, vector<1x2x128xf32>,
    return
  }
  func.func @transform_0(%arg0: i32) -> (i32, i32) {
    %c0_i32 = arith.constant 0 : i32
    %c0_i32_0 = arith.constant 0 : i32
    return %arg0, %c0_i32 : i32, i32
  }
  func.func @transform_1(%arg0: i32) -> (i32, i32) {
    %c0_i32 = arith.constant 0 : i32
    %c0_i32_0 = arith.constant 0 : i32
    return %arg0, %c0_i32 : i32, i32
  }
  func.func @transform_2(%arg0: i32) -> (i32, i32) {
    %c0_i32 = arith.constant 0 : i32
    %c0_i32_0 = arith.constant 0 : i32
    %c0_i32_1 = arith.constant 0 : i32
    return %c0_i32, %c0_i32_0 : i32, i32
  }
  func.func @transform_3(%arg0: i32) -> (i32, i32) {
    %c0_i32 = arith.constant 0 : i32
    %c0_i32_0 = arith.constant 0 : i32
    %c0_i32_1 = arith.constant 0 : i32
    return %c0_i32, %c0_i32_0 : i32, i32
  }
  func.func @transform_4(%arg0: i32) -> (i32, i32, i32) {
    %c0_i32 = arith.constant 0 : i32
    %c0_i32_0 = arith.constant 0 : i32
    %c0_i32_1 = arith.constant 0 : i32
    return %arg0, %c0_i32, %c0_i32_0 : i32, i32, i32
  }
}

</mosaic_0001>

<llo_original>
// kernel: _forward_jit.1
$region0: #{_forward_jit.1}
  #allocation0 [shape = 'u32[]', space=smem, size = 0x4, offset = 0x4, fixed_abs, tag = 'smem constant byte address 0x4 - core index']
  #allocation1 [shape = 'u32[144,128]{1,0:T(1,128)}', space=vmem, size = 0x12000, scoped, tag = 'internal scratch']
  %s0 = inlined_call_operand.vmem [shape: f32[32,48], index: 0, kind: input, shape index: {}]
  %s1 = inlined_call_operand.vmem [shape: f32[32,8], index: 1, kind: input, shape index: {}]
  %s2 = inlined_call_operand.vmem [shape: f32[152,128], index: 2, kind: input, shape index: {}]
  %s3 = inlined_call_operand.vmem [shape: f32[6,128], index: 3, kind: input, shape index: {}]
  %s4 = inlined_call_operand.vmem [shape: f32[1,2,128], index: 4, kind: output, shape index: {}]
  %s5 = sld [smem:[#allocation0]]
  $region26: #{_forward_jit.1} parent=0
    _
  %s7 = ssub.s32 1, %s5
  %s8 = scalar_select 0, %s7, %s5
  // Predicated region
  $region2: #{_forward_jit.1} parent=0 // pred_check
    _
  $region3: #{_forward_jit.1} parent=0 // pred_check_branch
    %10 = sbr.rel (0) target = $region5
  $region4: #{_forward_jit.1} parent=0 // pred_region
    _
  $region5: #{_forward_jit.1} parent=0 // pred_fallthru
    _
  // Predicated region
  $region6: #{_forward_jit.1} parent=0 // pred_check
    _
  $region7: #{_forward_jit.1} parent=0 // pred_check_branch
    %12 = sbr.rel (0) target = $region9
  $region8: #{_forward_jit.1} parent=0 // pred_region
    _
  $region9: #{_forward_jit.1} parent=0 // pred_fallthru
    _
  // Predicated region
  $region10: #{_forward_jit.1} parent=0 // pred_check
    _
  $region11: #{_forward_jit.1} parent=0 // pred_check_branch
    %14 = sbr.rel (0) target = $region13
  $region12: #{_forward_jit.1} parent=0 // pred_region
    _
  $region13: #{_forward_jit.1} parent=0 // pred_fallthru
    _
  // Predicated region
  $region14: #{_forward_jit.1} parent=0 // pred_check
    _
  $region15: #{_forward_jit.1} parent=0 // pred_check_branch
    %16 = sbr.rel (0) target = $region17
  $region16: #{_forward_jit.1} parent=0 // pred_region
    _
  $region17: #{_forward_jit.1} parent=0 // pred_fallthru
    _
  %v17 = vld [vmem:[%s0] sm:$0xff]
  %v18 = vld [vmem:[%s0 + $0x8] sm:$0xff]
  %v19 = vld [vmem:[%s0 + $0x10] sm:$0xff]
  %v20 = vld [vmem:[%s0 + $0x18] sm:$0xff]
  %vm21 = vcmp.ne.f32.partialorder %v17, %v17
  %vm22 = vcmp.ne.f32.partialorder %v18, %v18
  %vm23 = vcmp.ne.f32.partialorder %v19, %v19
  %vm24 = vcmp.ne.f32.partialorder %v20, %v20
  %v25 = vsel %vm21, 0.0, %v17
  %v26 = vsel %vm22, 0.0, %v18
  %v27 = vsel %vm23, 0.0, %v19
  %v28 = vsel %vm24, 0.0, %v20
  %v29 = vmax.f32 %v25, -3.4028235e+38
  %v30 = vmax.f32 %v26, -3.4028235e+38
  %v31 = vmax.f32 %v27, -3.4028235e+38
  %v32 = vmax.f32 %v28, -3.4028235e+38
  %v33 = vmin.f32 %v29, 3.4028235e+38
  %v34 = vmin.f32 %v30, 3.4028235e+38
  %v35 = vmin.f32 %v31, 3.4028235e+38
  %v36 = vmin.f32 %v32, 3.4028235e+38
  %v37 = vld [vmem:[%s1] sm:$0xff]
  %v38 = vld [vmem:[%s1 + $0x8] sm:$0xff]
  %v39 = vld [vmem:[%s1 + $0x10] sm:$0xff]
  %v40 = vld [vmem:[%s1 + $0x18] sm:$0xff]
  %v41 = vld [vmem:[%s2] sm:$0xff]
  %v42 = vld [vmem:[%s3] sm:$0x1]
  %v43 = vlaneseq
  %v44 = vshrl.u32 %v43, 7
  %v45 = vsub.s32 0, %v44
  %v46 = vrot.slane %v42, %v45
  %vm47 = vcmask 64512
  %v49 = vsel %vm47, %v37, 0
  %v52 = vsel %vm47, %v38, 0
  %v55 = vsel %vm47, %v39, 0
  %v58 = vsel %vm47, %v40, 0
  %60 = vmatprep.subr.mxu0 0.0
  %61 = vmatpush1.msra.mxu0 %v41
  %62 = vmatprep.subr.mxu0 0.0
  %63 = vmatpush1.msra.mxu0 0.0
  %64 = vmatprep.subr.mxu0 0.0
  %65 = vmatpush1.msra.mxu0 0.0
  %66 = vmatprep.subr.mxu0 0.0
  %67 = vmatpush1.msra.mxu0 0.0
  %68 = vmatprep.subr.mxu0 0.0
  %69 = vmatpush1.msra.mxu0 0.0
  %70 = vmatprep.subr.mxu0 0.0
  %71 = vmatpush1.msra.mxu0 0.0
  %72 = vmatprep.subr.mxu0 0.0
  %73 = vmatpush1.msra.mxu0 0.0
  %74 = vmatprep.subr.mxu0 0.0
  %75 = vmatpush1.msra.mxu0 0.0
  %76 = vmatprep.subr.mxu0 0.0
  %77 = vmatpush1.msra.mxu0 0.0
  %78 = vmatprep.subr.mxu0 0.0
  %79 = vmatpush1.msra.mxu0 0.0
  %80 = vmatprep.subr.mxu0 0.0
  %81 = vmatpush1.msra.mxu0 0.0
  %82 = vmatprep.subr.mxu0 0.0
  %83 = vmatpush1.msra.mxu0 0.0
  %84 = vmatprep.subr.mxu0 0.0
  %85 = vmatpush1.msra.mxu0 0.0
  %86 = vmatprep.subr.mxu0 0.0
  %87 = vmatpush1.msra.mxu0 0.0
  %88 = vmatprep.subr.mxu0 0.0
  %89 = vmatpush1.msra.mxu0 0.0
  %90 = vmatprep.subr.mxu0 0.0
  %91 = vmatpush1.msra.mxu0 0.0
  %92 = vmatprep.subr.mxu0 0.0
  %93 = vmatpush1.msra.mxu0 0.0
  %94 = vmatprep.subr.mxu0 0.0
  %95 = vmatpush1.msra.mxu0 0.0
  %96 = vmatprep.subr.mxu0 0.0
  %97 = vmatpush1.msra.mxu0 0.0
  %98 = vmatprep.subr.mxu0 0.0
  %99 = vmatpush1.msra.mxu0 0.0
  %100 = vmatprep.subr.mxu0 0.0
  %101 = vmatpush1.msra.mxu0 0.0
  %102 = vmatprep.subr.mxu0 0.0
  %103 = vmatpush1.msra.mxu0 0.0
  %104 = vmatprep.subr.mxu0 0.0
  %105 = vmatpush1.msra.mxu0 0.0
  %106 = vmatprep.subr.mxu0 0.0
  %107 = vmatpush1.msra.mxu0 0.0
  %108 = vmatprep.subr.mxu0 0.0
  %109 = vmatpush1.msra.mxu0 0.0
  %110 = vmatprep.subr.mxu0 0.0
  %111 = vmatpush1.msra.mxu0 0.0
  %112 = vmatprep.subr.mxu0 0.0
  %113 = vmatpush1.msra.mxu0 0.0
  %114 = vmatprep.subr.mxu0 0.0
  %115 = vmatpush1.msra.mxu0 0.0
  %116 = vmatprep.subr.mxu0 0.0
  %117 = vmatpush1.msra.mxu0 0.0
  %118 = vmatprep.subr.mxu0 0.0
  %119 = vmatpush1.msra.mxu0 0.0
  %120 = vmatprep.subr.mxu0 0.0
  %121 = vmatpush1.msra.mxu0 0.0
  %122 = vmatprep.subr.mxu0 0.0
  %123 = vmatpush1.msra.mxu0 0.0
  %124 = vmatprep.mubr.f32.mxu0 0.0
  %125 = vmatmul.mubr.f32.gmra.mrb[0].mxu0 %v49
  %v126 = vpop.f32.mrb[0].mxu0
  %v127 = vadd.f32 %v46, %v126
  %v128 = vpop.f32.mrb[0].mxu0
  %129 = vmatprep.mubr.f32.mxu0 0.0
  %130 = vmatmul.mubr.f32.gmra.mrb[0].mxu0 %v52
  %v131 = vpop.f32.mrb[0].mxu0
  %v132 = vadd.f32 %v46, %v131
  %v133 = vpop.f32.mrb[0].mxu0
  %134 = vmatprep.mubr.f32.mxu0 0.0
  %135 = vmatmul.mubr.f32.gmra.mrb[0].mxu0 %v55
  %v136 = vpop.f32.mrb[0].mxu0
  %v137 = vadd.f32 %v46, %v136
  %v138 = vpop.f32.mrb[0].mxu0
  %139 = vmatprep.mubr.f32.mxu0 0.0
  %140 = vmatmul.mubr.f32.gmra.mrb[0].mxu0 %v58
  %v141 = vpop.f32.mrb[0].mxu0
  %v142 = vadd.f32 %v46, %v141
  %v143 = vpop.f32.mrb[0].mxu0
  %144 = vdwg.mxu0
  %147 = vrot.lane.b32.xlu0 %v127, 96
  %v148 = vpop.permute.xlu0 %147
  %149 = vrot.lane.b32.xlu0 %v132, 96
  %v150 = vpop.permute.xlu0 %149
  %151 = vrot.lane.b32.xlu0 %v127, 64
  %v152 = vpop.permute.xlu0 %151
  %153 = vrot.lane.b32.xlu0 %v132, 64
  %v154 = vpop.permute.xlu0 %153
  %155 = vrot.lane.b32.xlu0 %v148, 96
  %v156 = vpop.permute.xlu0 %155
  %157 = vrot.lane.b32.xlu0 %v150, 96
  %v158 = vpop.permute.xlu0 %157
  %159 = vrot.lane.b32.xlu0 %v152, 96
  %v160 = vpop.permute.xlu0 %159
  %161 = vrot.lane.b32.xlu0 %v154, 96
  %v162 = vpop.permute.xlu0 %161
  %vm169 = vcmask 392192
  %v171 = vsel %vm169, %v33, 0
  %v174 = vsel %vm169, %v34, 0
  %176 = vmatprep.subr.mxu0 0.0
  %177 = vmatpush1.msra.mxu0 %v148
  %178 = vmatprep.subr.mxu0 0.0
  %179 = vmatpush1.msra.mxu0 %v150
  %180 = vmatprep.subr.mxu0 0.0
  %181 = vmatpush1.msra.mxu0 %v156
  %182 = vmatprep.subr.mxu0 0.0
  %183 = vmatpush1.msra.mxu0 %v158
  %184 = vmatprep.subr.mxu0 0.0
  %185 = vmatpush1.msra.mxu0 %v160
  %186 = vmatprep.subr.mxu0 0.0
  %187 = vmatpush1.msra.mxu0 %v162
  %188 = vmatprep.subr.mxu0 0.0
  %189 = vmatpush1.msra.mxu0 0.0
  %190 = vmatprep.subr.mxu0 0.0
  %191 = vmatpush1.msra.mxu0 0.0
  %192 = vmatprep.subr.mxu0 0.0
  %193 = vmatpush1.msra.mxu0 0.0
  %194 = vmatprep.subr.mxu0 0.0
  %195 = vmatpush1.msra.mxu0 0.0
  %196 = vmatprep.subr.mxu0 0.0
  %197 = vmatpush1.msra.mxu0 0.0
  %198 = vmatprep.subr.mxu0 0.0
  %199 = vmatpush1.msra.mxu0 0.0
  %200 = vmatprep.subr.mxu0 0.0
  %201 = vmatpush1.msra.mxu0 0.0
  %202 = vmatprep.subr.mxu0 0.0
  %203 = vmatpush1.msra.mxu0 0.0
  %204 = vmatprep.subr.mxu0 0.0
  %205 = vmatpush1.msra.mxu0 0.0
  %206 = vmatprep.subr.mxu0 0.0
  %207 = vmatpush1.msra.mxu0 0.0
  %208 = vmatprep.subr.mxu0 0.0
  %209 = vmatpush1.msra.mxu0 0.0
  %210 = vmatprep.subr.mxu0 0.0
  %211 = vmatpush1.msra.mxu0 0.0
  %212 = vmatprep.subr.mxu0 0.0
  %213 = vmatpush1.msra.mxu0 0.0
  %214 = vmatprep.subr.mxu0 0.0
  %215 = vmatpush1.msra.mxu0 0.0
  %216 = vmatprep.subr.mxu0 0.0
  %217 = vmatpush1.msra.mxu0 0.0
  %218 = vmatprep.subr.mxu0 0.0
  %219 = vmatpush1.msra.mxu0 0.0
  %220 = vmatprep.subr.mxu0 0.0
  %221 = vmatpush1.msra.mxu0 0.0
  %222 = vmatprep.subr.mxu0 0.0
  %223 = vmatpush1.msra.mxu0 0.0
  %224 = vmatprep.subr.mxu0 0.0
  %225 = vmatpush1.msra.mxu0 0.0
  %226 = vmatprep.subr.mxu0 0.0
  %227 = vmatpush1.msra.mxu0 0.0
  %228 = vmatprep.subr.mxu0 0.0
  %229 = vmatpush1.msra.mxu0 0.0
  %230 = vmatprep.subr.mxu0 0.0
  %231 = vmatpush1.msra.mxu0 0.0
  %232 = vmatprep.subr.mxu0 0.0
  %233 = vmatpush1.msra.mxu0 0.0
  %234 = vmatprep.subr.mxu0 0.0
  %235 = vmatpush1.msra.mxu0 0.0
  %236 = vmatprep.subr.mxu0 0.0
  %237 = vmatpush1.msra.mxu0 0.0
  %238 = vmatprep.subr.mxu0 0.0
  %239 = vmatpush1.msra.mxu0 0.0
  %240 = vmatprep.mubr.f32.mxu0 0.0
  %241 = vmatmul.mubr.f32.gmra.mrb[0].mxu0 %v171
  %v242 = vpop.f32.mrb[0].mxu0
  %v243 = vadd.f32 0.0, %v242
  %v244 = vpop.f32.mrb[0].mxu0
  %245 = vmatprep.mubr.f32.mxu0 0.0
  %246 = vmatmul.mubr.f32.gmra.mrb[0].mxu0 %v174
  %v247 = vpop.f32.mrb[0].mxu0
  %v248 = vadd.f32 0.0, %v247
  %v249 = vpop.f32.mrb[0].mxu0
  %250 = vdwg.mxu0
  %v251 = vadd.f32 %v127, %v243
  %v252 = vadd.f32 %v132, %v248
  %255 = vrot.lane.b32.xlu0 %v137, 96
  %v256 = vpop.permute.xlu0 %255
  %257 = vrot.lane.b32.xlu0 %v142, 96
  %v258 = vpop.permute.xlu0 %257
  %259 = vrot.lane.b32.xlu0 %v137, 64
  %v260 = vpop.permute.xlu0 %259
  %261 = vrot.lane.b32.xlu0 %v142, 64
  %v262 = vpop.permute.xlu0 %261
  %263 = vrot.lane.b32.xlu0 %v256, 96
  %v264 = vpop.permute.xlu0 %263
  %265 = vrot.lane.b32.xlu0 %v258, 96
  %v266 = vpop.permute.xlu0 %265
  %267 = vrot.lane.b32.xlu0 %v260, 96
  %v268 = vpop.permute.xlu0 %267
  %269 = vrot.lane.b32.xlu0 %v262, 96
  %v270 = vpop.permute.xlu0 %269
  %v278 = vsel %vm169, %v35, 0
  %v281 = vsel %vm169, %v36, 0
  %283 = vmatprep.subr.mxu0 0.0
  %284 = vmatpush1.msra.mxu0 %v256
  %285 = vmatprep.subr.mxu0 0.0
  %286 = vmatpush1.msra.mxu0 %v258
  %287 = vmatprep.subr.mxu0 0.0
  %288 = vmatpush1.msra.mxu0 %v264
  %289 = vmatprep.subr.mxu0 0.0
  %290 = vmatpush1.msra.mxu0 %v266
  %291 = vmatprep.subr.mxu0 0.0
  %292 = vmatpush1.msra.mxu0 %v268
  %293 = vmatprep.subr.mxu0 0.0
  %294 = vmatpush1.msra.mxu0 %v270
  %295 = vmatprep.subr.mxu0 0.0
  %296 = vmatpush1.msra.mxu0 0.0
  %297 = vmatprep.subr.mxu0 0.0
  %298 = vmatpush1.msra.mxu0 0.0
  %299 = vmatprep.subr.mxu0 0.0
  %300 = vmatpush1.msra.mxu0 0.0
  %301 = vmatprep.subr.mxu0 0.0
  %302 = vmatpush1.msra.mxu0 0.0
  %303 = vmatprep.subr.mxu0 0.0
  %304 = vmatpush1.msra.mxu0 0.0
  %305 = vmatprep.subr.mxu0 0.0
  %306 = vmatpush1.msra.mxu0 0.0
  %307 = vmatprep.subr.mxu0 0.0
  %308 = vmatpush1.msra.mxu0 0.0
  %309 = vmatprep.subr.mxu0 0.0
  %310 = vmatpush1.msra.mxu0 0.0
  %311 = vmatprep.subr.mxu0 0.0
  %312 = vmatpush1.msra.mxu0 0.0
  %313 = vmatprep.subr.mxu0 0.0
  %314 = vmatpush1.msra.mxu0 0.0
  %315 = vmatprep.subr.mxu0 0.0
  %316 = vmatpush1.msra.mxu0 0.0
  %317 = vmatprep.subr.mxu0 0.0
  %318 = vmatpush1.msra.mxu0 0.0
  %319 = vmatprep.subr.mxu0 0.0
  %320 = vmatpush1.msra.mxu0 0.0
  %321 = vmatprep.subr.mxu0 0.0
  %322 = vmatpush1.msra.mxu0 0.0
  %323 = vmatprep.subr.mxu0 0.0
  %324 = vmatpush1.msra.mxu0 0.0
  %325 = vmatprep.subr.mxu0 0.0
  %326 = vmatpush1.msra.mxu0 0.0
  %327 = vmatprep.subr.mxu0 0.0
  %328 = vmatpush1.msra.mxu0 0.0
  %329 = vmatprep.subr.mxu0 0.0
  %330 = vmatpush1.msra.mxu0 0.0
  %331 = vmatprep.subr.mxu0 0.0
  %332 = vmatpush1.msra.mxu0 0.0
  %333 = vmatprep.subr.mxu0 0.0
  %334 = vmatpush1.msra.mxu0 0.0
  %335 = vmatprep.subr.mxu0 0.0
  %336 = vmatpush1.msra.mxu0 0.0
  %337 = vmatprep.subr.mxu0 0.0
  %338 = vmatpush1.msra.mxu0 0.0
  %339 = vmatprep.subr.mxu0 0.0
  %340 = vmatpush1.msra.mxu0 0.0
  %341 = vmatprep.subr.mxu0 0.0
  %342 = vmatpush1.msra.mxu0 0.0
  %343 = vmatprep.subr.mxu0 0.0
  %344 = vmatpush1.msra.mxu0 0.0
  %345 = vmatprep.subr.mxu0 0.0
  %346 = vmatpush1.msra.mxu0 0.0
  %347 = vmatprep.mubr.f32.mxu0 0.0
  %348 = vmatmul.mubr.f32.gmra.mrb[0].mxu0 %v278
  %v349 = vpop.f32.mrb[0].mxu0
  %v350 = vadd.f32 0.0, %v349
  %v351 = vpop.f32.mrb[0].mxu0
  %352 = vmatprep.mubr.f32.mxu0 0.0
  %353 = vmatmul.mubr.f32.gmra.mrb[0].mxu0 %v281
  %v354 = vpop.f32.mrb[0].mxu0
  %v355 = vadd.f32 0.0, %v354
  %v356 = vpop.f32.mrb[0].mxu0
  %357 = vdwg.mxu0
  %v358 = vadd.f32 %v137, %v350
  %v359 = vadd.f32 %v142, %v355
  %v360 = vtanh.pop %v251
  %v361 = vtanh.pop %v252
  %v362 = vtanh.pop %v358
  %v363 = vtanh.pop %v359
  %364 = vrot.lane.b32.xlu0 %v37, 32
  %v365 = vpop.permute.xlu0 %364
  %366 = vrot.lane.b32.xlu0 %v38, 32
  %v367 = vpop.permute.xlu0 %366
  %368 = vrot.lane.b32.xlu0 %v39, 32
  %v369 = vpop.permute.xlu0 %368
  %370 = vrot.lane.b32.xlu0 %v40, 32
  %v371 = vpop.permute.xlu0 %370
  %vm376 = vcmask 261120
  %v377 = vsel %vm376, %v360, %v365
  %v378 = vsel %vm376, %v361, %v367
  %v379 = vsel %vm376, %v362, %v369
  %v380 = vsel %vm376, %v363, %v371
  %v381 = vld [vmem:[%s2 + $0x8] sm:$0xff]
  %v382 = vld [vmem:[%s2 + $0x10] sm:$0xff]
  %v383 = vld [vmem:[%s2 + $0x18] sm:$0xff]
  %v384 = vld [vmem:[%s2 + $0x20] sm:$0xff]
  %v385 = vld [vmem:[%s2 + $0x28] sm:$0xff]
  %v386 = vld [vmem:[%s3 + $0x1] sm:$0x1]
  %v387 = vlaneseq
  %v388 = vshrl.u32 %v387, 7
  %v389 = vsub.s32 0, %v388
  %v390 = vrot.slane %v386, %v389
  %vm391 = vcmask 326656
  %v393 = vsel %vm391, %v377, 0
  %v396 = vsel %vm391, %v378, 0
  %v399 = vsel %vm391, %v379, 0
  %v402 = vsel %vm391, %v380, 0
  %404 = vmatprep.subr.mxu0 0.0
  %405 = vmatpush1.msra.mxu0 %v381
  %406 = vmatprep.subr.mxu0 0.0
  %407 = vmatpush1.msra.mxu0 %v382
  %408 = vmatprep.subr.mxu0 0.0
  %409 = vmatpush1.msra.mxu0 %v383
  %410 = vmatprep.subr.mxu0 0.0
  %411 = vmatpush1.msra.mxu0 %v384
  %412 = vmatprep.subr.mxu0 0.0
  %413 = vmatpush1.msra.mxu0 %v385
  %414 = vmatprep.subr.mxu0 0.0
  %415 = vmatpush1.msra.mxu0 0.0
  %416 = vmatprep.subr.mxu0 0.0
  %417 = vmatpush1.msra.mxu0 0.0
  %418 = vmatprep.subr.mxu0 0.0
  %419 = vmatpush1.msra.mxu0 0.0
  %420 = vmatprep.subr.mxu0 0.0
  %421 = vmatpush1.msra.mxu0 0.0
  %422 = vmatprep.subr.mxu0 0.0
  %423 = vmatpush1.msra.mxu0 0.0
  %424 = vmatprep.subr.mxu0 0.0
  %425 = vmatpush1.msra.mxu0 0.0
  %426 = vmatprep.subr.mxu0 0.0
  %427 = vmatpush1.msra.mxu0 0.0
  %428 = vmatprep.subr.mxu0 0.0
  %429 = vmatpush1.msra.mxu0 0.0
  %430 = vmatprep.subr.mxu0 0.0
  %431 = vmatpush1.msra.mxu0 0.0
  %432 = vmatprep.subr.mxu0 0.0
  %433 = vmatpush1.msra.mxu0 0.0
  %434 = vmatprep.subr.mxu0 0.0
  %435 = vmatpush1.msra.mxu0 0.0
  %436 = vmatprep.subr.mxu0 0.0
  %437 = vmatpush1.msra.mxu0 0.0
  %438 = vmatprep.subr.mxu0 0.0
  %439 = vmatpush1.msra.mxu0 0.0
  %440 = vmatprep.subr.mxu0 0.0
  %441 = vmatpush1.msra.mxu0 0.0
  %442 = vmatprep.subr.mxu0 0.0
  %443 = vmatpush1.msra.mxu0 0.0
  %444 = vmatprep.subr.mxu0 0.0
  %445 = vmatpush1.msra.mxu0 0.0
  %446 = vmatprep.subr.mxu0 0.0
  %447 = vmatpush1.msra.mxu0 0.0
  %448 = vmatprep.subr.mxu0 0.0
  %449 = vmatpush1.msra.mxu0 0.0
  %450 = vmatprep.subr.mxu0 0.0
  %451 = vmatpush1.msra.mxu0 0.0
  %452 = vmatprep.subr.mxu0 0.0
  %453 = vmatpush1.msra.mxu0 0.0
  %454 = vmatprep.subr.mxu0 0.0
  %455 = vmatpush1.msra.mxu0 0.0
  %456 = vmatprep.subr.mxu0 0.0
  %457 = vmatpush1.msra.mxu0 0.0
  %458 = vmatprep.subr.mxu0 0.0
  %459 = vmatpush1.msra.mxu0 0.0
  %460 = vmatprep.subr.mxu0 0.0
  %461 = vmatpush1.msra.mxu0 0.0
  %462 = vmatprep.subr.mxu0 0.0
  %463 = vmatpush1.msra.mxu0 0.0
  %464 = vmatprep.subr.mxu0 0.0
  %465 = vmatpush1.msra.mxu0 0.0
  %466 = vmatprep.subr.mxu0 0.0
  %467 = vmatpush1.msra.mxu0 0.0
  %468 = vmatprep.mubr.f32.mxu0 0.0
  %469 = vmatmul.mubr.f32.gmra.mrb[0].mxu0 %v393
  %v470 = vpop.f32.mrb[0].mxu0
  %v471 = vadd.f32 %v390, %v470
  %v472 = vpop.f32.mrb[0].mxu0
  %473 = vmatprep.mubr.f32.mxu0 0.0
  %474 = vmatmul.mubr.f32.gmra.mrb[0].mxu0 %v396
  %v475 = vpop.f32.mrb[0].mxu0
  %v476 = vadd.f32 %v390, %v475
  %v477 = vpop.f32.mrb[0].mxu0
  %478 = vmatprep.mubr.f32.mxu0 0.0
  %479 = vmatmul.mubr.f32.gmra.mrb[0].mxu0 %v399
  %v480 = vpop.f32.mrb[0].mxu0
  %v481 = vadd.f32 %v390, %v480
  %v482 = vpop.f32.mrb[0].mxu0
  %483 = vmatprep.mubr.f32.mxu0 0.0
  %484 = vmatmul.mubr.f32.gmra.mrb[0].mxu0 %v402
  %v485 = vpop.f32.mrb[0].mxu0
  %v486 = vadd.f32 %v390, %v485
  %v487 = vpop.f32.mrb[0].mxu0
  %488 = vdwg.mxu0
  %491 = vrot.lane.b32.xlu0 %v471, 112
  %v492 = vpop.permute.xlu0 %491
  %493 = vrot.lane.b32.xlu0 %v476, 112
  %v494 = vpop.permute.xlu0 %493
  %495 = vrot.lane.b32.xlu0 %v471, 96
  %v496 = vpop.permute.xlu0 %495
  %497 = vrot.lane.b32.xlu0 %v476, 96
  %v498 = vpop.permute.xlu0 %497
  %499 = vrot.lane.b32.xlu0 %v492, 112
  %v500 = vpop.permute.xlu0 %499
  %501 = vrot.lane.b32.xlu0 %v494, 112
  %v502 = vpop.permute.xlu0 %501
  %503 = vrot.lane.b32.xlu0 %v496, 112
  %v504 = vpop.permute.xlu0 %503
  %505 = vrot.lane.b32.xlu0 %v498, 112
  %v506 = vpop.permute.xlu0 %505
  %513 = vmatprep.subr.mxu0 0.0
  %514 = vmatpush1.msra.mxu0 %v492
  %515 = vmatprep.subr.mxu0 0.0
  %516 = vmatpush1.msra.mxu0 %v494
  %517 = vmatprep.subr.mxu0 0.0
  %518 = vmatpush1.msra.mxu0 %v500
  %519 = vmatprep.subr.mxu0 0.0
  %520 = vmatpush1.msra.mxu0 %v502
  %521 = vmatprep.subr.mxu0 0.0
  %522 = vmatpush1.msra.mxu0 %v504
  %523 = vmatprep.subr.mxu0 0.0
  %524 = vmatpush1.msra.mxu0 %v506
  %525 = vmatprep.subr.mxu0 0.0
  %526 = vmatpush1.msra.mxu0 0.0
  %527 = vmatprep.subr.mxu0 0.0
  %528 = vmatpush1.msra.mxu0 0.0
  %529 = vmatprep.subr.mxu0 0.0
  %530 = vmatpush1.msra.mxu0 0.0
  %531 = vmatprep.subr.mxu0 0.0
  %532 = vmatpush1.msra.mxu0 0.0
  %533 = vmatprep.subr.mxu0 0.0
  %534 = vmatpush1.msra.mxu0 0.0
  %535 = vmatprep.subr.mxu0 0.0
  %536 = vmatpush1.msra.mxu0 0.0
  %537 = vmatprep.subr.mxu0 0.0
  %538 = vmatpush1.msra.mxu0 0.0
  %539 = vmatprep.subr.mxu0 0.0
  %540 = vmatpush1.msra.mxu0 0.0
  %541 = vmatprep.subr.mxu0 0.0
  %542 = vmatpush1.msra.mxu0 0.0
  %543 = vmatprep.subr.mxu0 0.0
  %544 = vmatpush1.msra.mxu0 0.0
  %545 = vmatprep.subr.mxu0 0.0
  %546 = vmatpush1.msra.mxu0 0.0
  %547 = vmatprep.subr.mxu0 0.0
  %548 = vmatpush1.msra.mxu0 0.0
  %549 = vmatprep.subr.mxu0 0.0
  %550 = vmatpush1.msra.mxu0 0.0
  %551 = vmatprep.subr.mxu0 0.0
  %552 = vmatpush1.msra.mxu0 0.0
  %553 = vmatprep.subr.mxu0 0.0
  %554 = vmatpush1.msra.mxu0 0.0
  %555 = vmatprep.subr.mxu0 0.0
  %556 = vmatpush1.msra.mxu0 0.0
  %557 = vmatprep.subr.mxu0 0.0
  %558 = vmatpush1.msra.mxu0 0.0
  %559 = vmatprep.subr.mxu0 0.0
  %560 = vmatpush1.msra.mxu0 0.0
  %561 = vmatprep.subr.mxu0 0.0
  %562 = vmatpush1.msra.mxu0 0.0
  %563 = vmatprep.subr.mxu0 0.0
  %564 = vmatpush1.msra.mxu0 0.0
  %565 = vmatprep.subr.mxu0 0.0
  %566 = vmatpush1.msra.mxu0 0.0
  %567 = vmatprep.subr.mxu0 0.0
  %568 = vmatpush1.msra.mxu0 0.0
  %569 = vmatprep.subr.mxu0 0.0
  %570 = vmatpush1.msra.mxu0 0.0
  %571 = vmatprep.subr.mxu0 0.0
  %572 = vmatpush1.msra.mxu0 0.0
  %573 = vmatprep.subr.mxu0 0.0
  %574 = vmatpush1.msra.mxu0 0.0
  %575 = vmatprep.subr.mxu0 0.0
  %576 = vmatpush1.msra.mxu0 0.0
  %577 = vmatprep.mubr.f32.mxu0 0.0
  %578 = vmatmul.mubr.f32.gmra.mrb[0].mxu0 %v171
  %v579 = vpop.f32.mrb[0].mxu0
  %v580 = vadd.f32 0.0, %v579
  %v581 = vpop.f32.mrb[0].mxu0
  %582 = vmatprep.mubr.f32.mxu0 0.0
  %583 = vmatmul.mubr.f32.gmra.mrb[0].mxu0 %v174
  %v584 = vpop.f32.mrb[0].mxu0
  %v585 = vadd.f32 0.0, %v584
  %v586 = vpop.f32.mrb[0].mxu0
  %587 = vdwg.mxu0
  %v588 = vadd.f32 %v471, %v580
  %v589 = vadd.f32 %v476, %v585
  %592 = vrot.lane.b32.xlu0 %v481, 112
  %v593 = vpop.permute.xlu0 %592
  %594 = vrot.lane.b32.xlu0 %v486, 112
  %v595 = vpop.permute.xlu0 %594
  %596 = vrot.lane.b32.xlu0 %v481, 96
  %v597 = vpop.permute.xlu0 %596
  %598 = vrot.lane.b32.xlu0 %v486, 96
  %v599 = vpop.permute.xlu0 %598
  %600 = vrot.lane.b32.xlu0 %v593, 112
  %v601 = vpop.permute.xlu0 %600
  %602 = vrot.lane.b32.xlu0 %v595, 112
  %v603 = vpop.permute.xlu0 %602
  %604 = vrot.lane.b32.xlu0 %v597, 112
  %v605 = vpop.permute.xlu0 %604
  %606 = vrot.lane.b32.xlu0 %v599, 112
  %v607 = vpop.permute.xlu0 %606
  %614 = vmatprep.subr.mxu0 0.0
  %615 = vmatpush1.msra.mxu0 %v593
  %616 = vmatprep.subr.mxu0 0.0
  %617 = vmatpush1.msra.mxu0 %v595
  %618 = vmatprep.subr.mxu0 0.0
  %619 = vmatpush1.msra.mxu0 %v601
  %620 = vmatprep.subr.mxu0 0.0
  %621 = vmatpush1.msra.mxu0 %v603
  %622 = vmatprep.subr.mxu0 0.0
  %623 = vmatpush1.msra.mxu0 %v605
  %624 = vmatprep.subr.mxu0 0.0
  %625 = vmatpush1.msra.mxu0 %v607
  %626 = vmatprep.subr.mxu0 0.0
  %627 = vmatpush1.msra.mxu0 0.0
  %628 = vmatprep.subr.mxu0 0.0
  %629 = vmatpush1.msra.mxu0 0.0
  %630 = vmatprep.subr.mxu0 0.0
  %631 = vmatpush1.msra.mxu0 0.0
  %632 = vmatprep.subr.mxu0 0.0
  %633 = vmatpush1.msra.mxu0 0.0
  %634 = vmatprep.subr.mxu0 0.0
  %635 = vmatpush1.msra.mxu0 0.0
  %636 = vmatprep.subr.mxu0 0.0
  %637 = vmatpush1.msra.mxu0 0.0
  %638 = vmatprep.subr.mxu0 0.0
  %639 = vmatpush1.msra.mxu0 0.0
  %640 = vmatprep.subr.mxu0 0.0
  %641 = vmatpush1.msra.mxu0 0.0
  %642 = vmatprep.subr.mxu0 0.0
  %643 = vmatpush1.msra.mxu0 0.0
  %644 = vmatprep.subr.mxu0 0.0
  %645 = vmatpush1.msra.mxu0 0.0
  %646 = vmatprep.subr.mxu0 0.0
  %647 = vmatpush1.msra.mxu0 0.0
  %648 = vmatprep.subr.mxu0 0.0
  %649 = vmatpush1.msra.mxu0 0.0
  %650 = vmatprep.subr.mxu0 0.0
  %651 = vmatpush1.msra.mxu0 0.0
  %652 = vmatprep.subr.mxu0 0.0
  %653 = vmatpush1.msra.mxu0 0.0
  %654 = vmatprep.subr.mxu0 0.0
  %655 = vmatpush1.msra.mxu0 0.0
  %656 = vmatprep.subr.mxu0 0.0
  %657 = vmatpush1.msra.mxu0 0.0
  %658 = vmatprep.subr.mxu0 0.0
  %659 = vmatpush1.msra.mxu0 0.0
  %660 = vmatprep.subr.mxu0 0.0
  %661 = vmatpush1.msra.mxu0 0.0
  %662 = vmatprep.subr.mxu0 0.0
  %663 = vmatpush1.msra.mxu0 0.0
  %664 = vmatprep.subr.mxu0 0.0
  %665 = vmatpush1.msra.mxu0 0.0
  %666 = vmatprep.subr.mxu0 0.0
  %667 = vmatpush1.msra.mxu0 0.0
  %668 = vmatprep.subr.mxu0 0.0
  %669 = vmatpush1.msra.mxu0 0.0
  %670 = vmatprep.subr.mxu0 0.0
  %671 = vmatpush1.msra.mxu0 0.0
  %672 = vmatprep.subr.mxu0 0.0
  %673 = vmatpush1.msra.mxu0 0.0
  %674 = vmatprep.subr.mxu0 0.0
  %675 = vmatpush1.msra.mxu0 0.0
  %676 = vmatprep.subr.mxu0 0.0
  %677 = vmatpush1.msra.mxu0 0.0
  %678 = vmatprep.mubr.f32.mxu0 0.0
  %679 = vmatmul.mubr.f32.gmra.mrb[0].mxu0 %v278
  %v680 = vpop.f32.mrb[0].mxu0
  %v681 = vadd.f32 0.0, %v680
  %v682 = vpop.f32.mrb[0].mxu0
  %683 = vmatprep.mubr.f32.mxu0 0.0
  %684 = vmatmul.mubr.f32.gmra.mrb[0].mxu0 %v281
  %v685 = vpop.f32.mrb[0].mxu0
  %v686 = vadd.f32 0.0, %v685
  %v687 = vpop.f32.mrb[0].mxu0
  %688 = vdwg.mxu0
  %v689 = vadd.f32 %v481, %v681
  %v690 = vadd.f32 %v486, %v686
  %v691 = vtanh.pop %v588
  %v692 = vtanh.pop %v589
  %v693 = vtanh.pop %v689
  %v694 = vtanh.pop %v690
  %695 = vrot.lane.b32.xlu0 %v37, 16
  %v696 = vpop.permute.xlu0 %695
  %697 = vrot.lane.b32.xlu0 %v38, 16
  %v698 = vpop.permute.xlu0 %697
  %699 = vrot.lane.b32.xlu0 %v39, 16
  %v700 = vpop.permute.xlu0 %699
  %701 = vrot.lane.b32.xlu0 %v40, 16
  %v702 = vpop.permute.xlu0 %701
  %vm707 = vcmask 130048
  %v708 = vsel %vm707, %v691, %v696
  %v709 = vsel %vm707, %v692, %v698
  %v710 = vsel %vm707, %v693, %v700
  %v711 = vsel %vm707, %v694, %v702
  %v712 = vld [vmem:[%s2 + $0x30] sm:$0xff]
  %v713 = vld [vmem:[%s2 + $0x38] sm:$0xff]
  %v714 = vld [vmem:[%s2 + $0x40] sm:$0xff]
  %v715 = vld [vmem:[%s3 + $0x2] sm:$0x1]
  %v716 = vlaneseq
  %v717 = vshrl.u32 %v716, 7
  %v718 = vsub.s32 0, %v717
  %v719 = vrot.slane %v715, %v718
  %vm720 = vcmask 195584
  %v722 = vsel %vm720, %v708, 0
  %v725 = vsel %vm720, %v709, 0
  %v728 = vsel %vm720, %v710, 0
  %v731 = vsel %vm720, %v711, 0
  %733 = vmatprep.subr.mxu0 0.0
  %734 = vmatpush1.msra.mxu0 %v712
  %735 = vmatprep.subr.mxu0 0.0
  %736 = vmatpush1.msra.mxu0 %v713
  %737 = vmatprep.subr.mxu0 0.0
  %738 = vmatpush1.msra.mxu0 %v714
  %739 = vmatprep.subr.mxu0 0.0
  %740 = vmatpush1.msra.mxu0 0.0
  %741 = vmatprep.subr.mxu0 0.0
  %742 = vmatpush1.msra.mxu0 0.0
  %743 = vmatprep.subr.mxu0 0.0
  %744 = vmatpush1.msra.mxu0 0.0
  %745 = vmatprep.subr.mxu0 0.0
  %746 = vmatpush1.msra.mxu0 0.0
  %747 = vmatprep.subr.mxu0 0.0
  %748 = vmatpush1.msra.mxu0 0.0
  %749 = vmatprep.subr.mxu0 0.0
  %750 = vmatpush1.msra.mxu0 0.0
  %751 = vmatprep.subr.mxu0 0.0
  %752 = vmatpush1.msra.mxu0 0.0
  %753 = vmatprep.subr.mxu0 0.0
  %754 = vmatpush1.msra.mxu0 0.0
  %755 = vmatprep.subr.mxu0 0.0
  %756 = vmatpush1.msra.mxu0 0.0
  %757 = vmatprep.subr.mxu0 0.0
  %758 = vmatpush1.msra.mxu0 0.0
  %759 = vmatprep.subr.mxu0 0.0
  %760 = vmatpush1.msra.mxu0 0.0
  %761 = vmatprep.subr.mxu0 0.0
  %762 = vmatpush1.msra.mxu0 0.0
  %763 = vmatprep.subr.mxu0 0.0
  %764 = vmatpush1.msra.mxu0 0.0
  %765 = vmatprep.subr.mxu0 0.0
  %766 = vmatpush1.msra.mxu0 0.0
  %767 = vmatprep.subr.mxu0 0.0
  %768 = vmatpush1.msra.mxu0 0.0
  %769 = vmatprep.subr.mxu0 0.0
  %770 = vmatpush1.msra.mxu0 0.0
  %771 = vmatprep.subr.mxu0 0.0
  %772 = vmatpush1.msra.mxu0 0.0
  %773 = vmatprep.subr.mxu0 0.0
  %774 = vmatpush1.msra.mxu0 0.0
  %775 = vmatprep.subr.mxu0 0.0
  %776 = vmatpush1.msra.mxu0 0.0
  %777 = vmatprep.subr.mxu0 0.0
  %778 = vmatpush1.msra.mxu0 0.0
  %779 = vmatprep.subr.mxu0 0.0
  %780 = vmatpush1.msra.mxu0 0.0
  %781 = vmatprep.subr.mxu0 0.0
  %782 = vmatpush1.msra.mxu0 0.0
  %783 = vmatprep.subr.mxu0 0.0
  %784 = vmatpush1.msra.mxu0 0.0
  %785 = vmatprep.subr.mxu0 0.0
  %786 = vmatpush1.msra.mxu0 0.0
  %787 = vmatprep.subr.mxu0 0.0
  %788 = vmatpush1.msra.mxu0 0.0
  %789 = vmatprep.subr.mxu0 0.0
  %790 = vmatpush1.msra.mxu0 0.0
  %791 = vmatprep.subr.mxu0 0.0
  %792 = vmatpush1.msra.mxu0 0.0
  %793 = vmatprep.subr.mxu0 0.0
  %794 = vmatpush1.msra.mxu0 0.0
  %795 = vmatprep.subr.mxu0 0.0
  %796 = vmatpush1.msra.mxu0 0.0
  %797 = vmatprep.mubr.f32.mxu0 0.0
  %798 = vmatmul.mubr.f32.gmra.mrb[0].mxu0 %v722
  %v799 = vpop.f32.mrb[0].mxu0
  %v800 = vadd.f32 %v719, %v799
  %v801 = vpop.f32.mrb[0].mxu0
  %802 = vmatprep.mubr.f32.mxu0 0.0
  %803 = vmatmul.mubr.f32.gmra.mrb[0].mxu0 %v725
  %v804 = vpop.f32.mrb[0].mxu0
  %v805 = vadd.f32 %v719, %v804
  %v806 = vpop.f32.mrb[0].mxu0
  %807 = vmatprep.mubr.f32.mxu0 0.0
  %808 = vmatmul.mubr.f32.gmra.mrb[0].mxu0 %v728
  %v809 = vpop.f32.mrb[0].mxu0
  %v810 = vadd.f32 %v719, %v809
  %v811 = vpop.f32.mrb[0].mxu0
  %812 = vmatprep.mubr.f32.mxu0 0.0
  %813 = vmatmul.mubr.f32.gmra.mrb[0].mxu0 %v731
  %v814 = vpop.f32.mrb[0].mxu0
  %v815 = vadd.f32 %v719, %v814
  %v816 = vpop.f32.mrb[0].mxu0
  %817 = vdwg.mxu0
  %v818 = vxor.u32 %v800, 2147483648
  %v819 = vxor.u32 %v805, 2147483648
  %v820 = vxor.u32 %v810, 2147483648
  %v821 = vxor.u32 %v815, 2147483648
  %v822 = vmul.f32 %v818, 1.442695
  %v823 = vpow.pop %v822
  %v824 = vmul.f32 %v819, 1.442695
  %v825 = vpow.pop %v824
  %v826 = vmul.f32 %v820, 1.442695
  %v827 = vpow.pop %v826
  %v828 = vmul.f32 %v821, 1.442695
  %v829 = vpow.pop %v828
  %v830 = vadd.f32 %v823, 1.0
  %v831 = vadd.f32 %v825, 1.0
  %v832 = vadd.f32 %v827, 1.0
  %v833 = vadd.f32 %v829, 1.0
  %v834 = vrcp.pop %v830
  %v835 = vmul.f32 1.0, %v834
  %v836 = vrcp.pop %v831
  %v837 = vmul.f32 1.0, %v836
  %v838 = vrcp.pop %v832
  %v839 = vmul.f32 1.0, %v838
  %v840 = vrcp.pop %v833
  %v841 = vmul.f32 1.0, %v840
  %v842 = vtanh.pop %v800
  %v843 = vtanh.pop %v805
  %v844 = vtanh.pop %v810
  %v845 = vtanh.pop %v815
  %850 = vrot.lane.b32.xlu0 %v842, 96
  %v851 = vpop.permute.xlu0 %850
  %852 = vrot.lane.b32.xlu0 %v843, 96
  %v853 = vpop.permute.xlu0 %852
  %854 = vrot.lane.b32.xlu0 %v844, 96
  %v855 = vpop.permute.xlu0 %854
  %856 = vrot.lane.b32.xlu0 %v845, 96
  %v857 = vpop.permute.xlu0 %856
  %v862 = vmul.f32 %v835, %v851
  %v863 = vmul.f32 %v837, %v853
  %v864 = vmul.f32 %v839, %v855
  %v865 = vmul.f32 %v841, %v857
  %v866 = vsel %vm376, %v862, 0.0
  %v867 = vsel %vm376, %v863, 0.0
  %v868 = vadd.f32 %v866, %v867
  %v869 = vrot.slane %v868, 4
  %v870 = vadd.f32 %v868, %v869
  %v871 = vrot.slane %v870, 2
  %v872 = vadd.f32 %v870, %v871
  %v873 = vrot.slane %v872, 1
  %v874 = vadd.f32 %v872, %v873
  %v875 = vsel %vm376, %v864, 0.0
  %v876 = vsel %vm376, %v865, 0.0
  %v877 = vadd.f32 %v875, %v876
  %v878 = vrot.slane %v877, 4
  %v879 = vadd.f32 %v877, %v878
  %v880 = vrot.slane %v879, 2
  %v881 = vadd.f32 %v879, %v880
  %v882 = vrot.slane %v881, 1
  %v883 = vadd.f32 %v881, %v882
  %vm884 = vcmask 1040384
  %v885 = vsel %vm884, %v874, %v883
  %v886 = vtanh.pop %v885
  %v887 = vld [vmem:[%s2 + $0x48] sm:$0xff]
  %v888 = vld [vmem:[%s2 + $0x50] sm:$0xff]
  %v889 = vld [vmem:[%s2 + $0x58] sm:$0xff]
  %v890 = vld [vmem:[%s2 + $0x60] sm:$0xff]
  %v891 = vld [vmem:[%s3 + $0x3] sm:$0x1]
  %v892 = vlaneseq
  %v893 = vshrl.u32 %v892, 7
  %v894 = vsub.s32 0, %v893
  %v895 = vrot.slane %v891, %v894
  %v897 = vsel %vm376, %v886, 0
  %899 = vmatprep.subr.mxu0 0.0
  %900 = vmatpush1.msra.mxu0 %v887
  %901 = vmatprep.subr.mxu0 0.0
  %902 = vmatpush1.msra.mxu0 %v888
  %903 = vmatprep.subr.mxu0 0.0
  %904 = vmatpush1.msra.mxu0 %v889
  %905 = vmatprep.subr.mxu0 0.0
  %906 = vmatpush1.msra.mxu0 %v890
  %907 = vmatprep.subr.mxu0 0.0
  %908 = vmatpush1.msra.mxu0 0.0
  %909 = vmatprep.subr.mxu0 0.0
  %910 = vmatpush1.msra.mxu0 0.0
  %911 = vmatprep.subr.mxu0 0.0
  %912 = vmatpush1.msra.mxu0 0.0
  %913 = vmatprep.subr.mxu0 0.0
  %914 = vmatpush1.msra.mxu0 0.0
  %915 = vmatprep.subr.mxu0 0.0
  %916 = vmatpush1.msra.mxu0 0.0
  %917 = vmatprep.subr.mxu0 0.0
  %918 = vmatpush1.msra.mxu0 0.0
  %919 = vmatprep.subr.mxu0 0.0
  %920 = vmatpush1.msra.mxu0 0.0
  %921 = vmatprep.subr.mxu0 0.0
  %922 = vmatpush1.msra.mxu0 0.0
  %923 = vmatprep.subr.mxu0 0.0
  %924 = vmatpush1.msra.mxu0 0.0
  %925 = vmatprep.subr.mxu0 0.0
  %926 = vmatpush1.msra.mxu0 0.0
  %927 = vmatprep.subr.mxu0 0.0
  %928 = vmatpush1.msra.mxu0 0.0
  %929 = vmatprep.subr.mxu0 0.0
  %930 = vmatpush1.msra.mxu0 0.0
  %931 = vmatprep.subr.mxu0 0.0
  %932 = vmatpush1.msra.mxu0 0.0
  %933 = vmatprep.subr.mxu0 0.0
  %934 = vmatpush1.msra.mxu0 0.0
  %935 = vmatprep.subr.mxu0 0.0
  %936 = vmatpush1.msra.mxu0 0.0
  %937 = vmatprep.subr.mxu0 0.0
  %938 = vmatpush1.msra.mxu0 0.0
  %939 = vmatprep.subr.mxu0 0.0
  %940 = vmatpush1.msra.mxu0 0.0
  %941 = vmatprep.subr.mxu0 0.0
  %942 = vmatpush1.msra.mxu0 0.0
  %943 = vmatprep.subr.mxu0 0.0
  %944 = vmatpush1.msra.mxu0 0.0
  %945 = vmatprep.subr.mxu0 0.0
  %946 = vmatpush1.msra.mxu0 0.0
  %947 = vmatprep.subr.mxu0 0.0
  %948 = vmatpush1.msra.mxu0 0.0
  %949 = vmatprep.subr.mxu0 0.0
  %950 = vmatpush1.msra.mxu0 0.0
  %951 = vmatprep.subr.mxu0 0.0
  %952 = vmatpush1.msra.mxu0 0.0
  %953 = vmatprep.subr.mxu0 0.0
  %954 = vmatpush1.msra.mxu0 0.0
  %955 = vmatprep.subr.mxu0 0.0
  %956 = vmatpush1.msra.mxu0 0.0
  %957 = vmatprep.subr.mxu0 0.0
  %958 = vmatpush1.msra.mxu0 0.0
  %959 = vmatprep.subr.mxu0 0.0
  %960 = vmatpush1.msra.mxu0 0.0
  %961 = vmatprep.subr.mxu0 0.0
  %962 = vmatpush1.msra.mxu0 0.0
  %963 = vmatprep.mubr.f32.mxu0 0.0
  %964 = vmatmul.mubr.f32.gmra.mrb[0].mxu0 %v897
  %v965 = vpop.f32.mrb[0].mxu0
  %v966 = vadd.f32 %v895, %v965
  %v967 = vpop.f32.mrb[0].mxu0
  %968 = vdwg.mxu0
  %v969 = vtanh.pop %v966
  %v970 = vld [vmem:[%s2 + $0x68] sm:$0xff]
  %v971 = vld [vmem:[%s2 + $0x70] sm:$0xff]
  %v972 = vld [vmem:[%s2 + $0x78] sm:$0xff]
  %v973 = vld [vmem:[%s2 + $0x80] sm:$0xff]
  %v974 = vld [vmem:[%s3 + $0x4] sm:$0x1]
  %v975 = vlaneseq
  %v976 = vshrl.u32 %v975, 7
  %v977 = vsub.s32 0, %v976
  %v978 = vrot.slane %v974, %v977
  %v980 = vsel %vm376, %v969, 0
  %982 = vmatprep.subr.mxu0 0.0
  %983 = vmatpush1.msra.mxu0 %v970
  %984 = vmatprep.subr.mxu0 0.0
  %985 = vmatpush1.msra.mxu0 %v971
  %986 = vmatprep.subr.mxu0 0.0
  %987 = vmatpush1.msra.mxu0 %v972
  %988 = vmatprep.subr.mxu0 0.0
  %989 = vmatpush1.msra.mxu0 %v973
  %990 = vmatprep.subr.mxu0 0.0
  %991 = vmatpush1.msra.mxu0 0.0
  %992 = vmatprep.subr.mxu0 0.0
  %993 = vmatpush1.msra.mxu0 0.0
  %994 = vmatprep.subr.mxu0 0.0
  %995 = vmatpush1.msra.mxu0 0.0
  %996 = vmatprep.subr.mxu0 0.0
  %997 = vmatpush1.msra.mxu0 0.0
  %998 = vmatprep.subr.mxu0 0.0
  %999 = vmatpush1.msra.mxu0 0.0
  %1000 = vmatprep.subr.mxu0 0.0
  %1001 = vmatpush1.msra.mxu0 0.0
  %1002 = vmatprep.subr.mxu0 0.0
  %1003 = vmatpush1.msra.mxu0 0.0
  %1004 = vmatprep.subr.mxu0 0.0
  %1005 = vmatpush1.msra.mxu0 0.0
  %1006 = vmatprep.subr.mxu0 0.0
  %1007 = vmatpush1.msra.mxu0 0.0
  %1008 = vmatprep.subr.mxu0 0.0
  %1009 = vmatpush1.msra.mxu0 0.0
  %1010 = vmatprep.subr.mxu0 0.0
  %1011 = vmatpush1.msra.mxu0 0.0
  %1012 = vmatprep.subr.mxu0 0.0
  %1013 = vmatpush1.msra.mxu0 0.0
  %1014 = vmatprep.subr.mxu0 0.0
  %1015 = vmatpush1.msra.mxu0 0.0
  %1016 = vmatprep.subr.mxu0 0.0
  %1017 = vmatpush1.msra.mxu0 0.0
  %1018 = vmatprep.subr.mxu0 0.0
  %1019 = vmatpush1.msra.mxu0 0.0
  %1020 = vmatprep.subr.mxu0 0.0
  %1021 = vmatpush1.msra.mxu0 0.0
  %1022 = vmatprep.subr.mxu0 0.0
  %1023 = vmatpush1.msra.mxu0 0.0
  %1024 = vmatprep.subr.mxu0 0.0
  %1025 = vmatpush1.msra.mxu0 0.0
  %1026 = vmatprep.subr.mxu0 0.0
  %1027 = vmatpush1.msra.mxu0 0.0
  %1028 = vmatprep.subr.mxu0 0.0
  %1029 = vmatpush1.msra.mxu0 0.0
  %1030 = vmatprep.subr.mxu0 0.0
  %1031 = vmatpush1.msra.mxu0 0.0
  %1032 = vmatprep.subr.mxu0 0.0
  %1033 = vmatpush1.msra.mxu0 0.0
  %1034 = vmatprep.subr.mxu0 0.0
  %1035 = vmatpush1.msra.mxu0 0.0
  %1036 = vmatprep.subr.mxu0 0.0
  %1037 = vmatpush1.msra.mxu0 0.0
  %1038 = vmatprep.subr.mxu0 0.0
  %1039 = vmatpush1.msra.mxu0 0.0
  %1040 = vmatprep.subr.mxu0 0.0
  %1041 = vmatpush1.msra.mxu0 0.0
  %1042 = vmatprep.subr.mxu0 0.0
  %1043 = vmatpush1.msra.mxu0 0.0
  %1044 = vmatprep.subr.mxu0 0.0
  %1045 = vmatpush1.msra.mxu0 0.0
  %1046 = vmatprep.mubr.f32.mxu0 0.0
  %1047 = vmatmul.mubr.f32.gmra.mrb[0].mxu0 %v980
  %v1048 = vpop.f32.mrb[0].mxu0
  %v1049 = vadd.f32 %v978, %v1048
  %v1050 = vpop.f32.mrb[0].mxu0
  %1051 = vdwg.mxu0
  %v1052 = vtanh.pop %v1049
  %v1053 = vld [vmem:[%s2 + $0x88] sm:$0xff]
  %v1054 = vld [vmem:[%s2 + $0x90] sm:$0xff]
  %v1055 = vld [vmem:[%s3 + $0x5] sm:$0x1]
  %v1056 = vlaneseq
  %v1057 = vshrl.u32 %v1056, 7
  %v1058 = vsub.s32 0, %v1057
  %v1059 = vrot.slane %v1055, %v1058
  %v1061 = vsel %vm707, %v1052, 0
  %1063 = vmatprep.subr.mxu0 0.0
  %1064 = vmatpush1.msra.mxu0 %v1053
  %1065 = vmatprep.subr.mxu0 0.0
  %1066 = vmatpush1.msra.mxu0 %v1054
  %1067 = vmatprep.subr.mxu0 0.0
  %1068 = vmatpush1.msra.mxu0 0.0
  %1069 = vmatprep.subr.mxu0 0.0
  %1070 = vmatpush1.msra.mxu0 0.0
  %1071 = vmatprep.subr.mxu0 0.0
  %1072 = vmatpush1.msra.mxu0 0.0
  %1073 = vmatprep.subr.mxu0 0.0
  %1074 = vmatpush1.msra.mxu0 0.0
  %1075 = vmatprep.subr.mxu0 0.0
  %1076 = vmatpush1.msra.mxu0 0.0
  %1077 = vmatprep.subr.mxu0 0.0
  %1078 = vmatpush1.msra.mxu0 0.0
  %1079 = vmatprep.subr.mxu0 0.0
  %1080 = vmatpush1.msra.mxu0 0.0
  %1081 = vmatprep.subr.mxu0 0.0
  %1082 = vmatpush1.msra.mxu0 0.0
  %1083 = vmatprep.subr.mxu0 0.0
  %1084 = vmatpush1.msra.mxu0 0.0
  %1085 = vmatprep.subr.mxu0 0.0
  %1086 = vmatpush1.msra.mxu0 0.0
  %1087 = vmatprep.subr.mxu0 0.0
  %1088 = vmatpush1.msra.mxu0 0.0
  %1089 = vmatprep.subr.mxu0 0.0
  %1090 = vmatpush1.msra.mxu0 0.0
  %1091 = vmatprep.subr.mxu0 0.0
  %1092 = vmatpush1.msra.mxu0 0.0
  %1093 = vmatprep.subr.mxu0 0.0
  %1094 = vmatpush1.msra.mxu0 0.0
  %1095 = vmatprep.subr.mxu0 0.0
  %1096 = vmatpush1.msra.mxu0 0.0
  %1097 = vmatprep.subr.mxu0 0.0
  %1098 = vmatpush1.msra.mxu0 0.0
  %1099 = vmatprep.subr.mxu0 0.0
  %1100 = vmatpush1.msra.mxu0 0.0
  %1101 = vmatprep.subr.mxu0 0.0
  %1102 = vmatpush1.msra.mxu0 0.0
  %1103 = vmatprep.subr.mxu0 0.0
  %1104 = vmatpush1.msra.mxu0 0.0
  %1105 = vmatprep.subr.mxu0 0.0
  %1106 = vmatpush1.msra.mxu0 0.0
  %1107 = vmatprep.subr.mxu0 0.0
  %1108 = vmatpush1.msra.mxu0 0.0
  %1109 = vmatprep.subr.mxu0 0.0
  %1110 = vmatpush1.msra.mxu0 0.0
  %1111 = vmatprep.subr.mxu0 0.0
  %1112 = vmatpush1.msra.mxu0 0.0
  %1113 = vmatprep.subr.mxu0 0.0
  %1114 = vmatpush1.msra.mxu0 0.0
  %1115 = vmatprep.subr.mxu0 0.0
  %1116 = vmatpush1.msra.mxu0 0.0
  %1117 = vmatprep.subr.mxu0 0.0
  %1118 = vmatpush1.msra.mxu0 0.0
  %1119 = vmatprep.subr.mxu0 0.0
  %1120 = vmatpush1.msra.mxu0 0.0
  %1121 = vmatprep.subr.mxu0 0.0
  %1122 = vmatpush1.msra.mxu0 0.0
  %1123 = vmatprep.subr.mxu0 0.0
  %1124 = vmatpush1.msra.mxu0 0.0
  %1125 = vmatprep.subr.mxu0 0.0
  %1126 = vmatpush1.msra.mxu0 0.0
  %1127 = vmatprep.mubr.f32.mxu0 0.0
  %1128 = vmatmul.mubr.f32.gmra.mrb[0].mxu0 %v1061
  %v1129 = vpop.f32.mrb[0].mxu0
  %v1130 = vadd.f32 %v1059, %v1129
  %v1131 = vpop.f32.mrb[0].mxu0
  %1132 = vdwg.mxu0
  %1133 = vst [vmem:[%s4] sm:$0x3] %v1130
  // Predicated region
  $region18: #{_forward_jit.1} parent=0 // pred_check
    _
  $region19: #{_forward_jit.1} parent=0 // pred_check_branch
    %1135 = sbr.rel (0) target = $region21
  $region20: #{_forward_jit.1} parent=0 // pred_region
    _
  $region21: #{_forward_jit.1} parent=0 // pred_fallthru
    _
  // Predicated region
  $region22: #{_forward_jit.1} parent=0 // pred_check
    _
  $region23: #{_forward_jit.1} parent=0 // pred_check_branch
    %1137 = sbr.rel (0) target = $region25
  $region24: #{_forward_jit.1} parent=0 // pred_region
    _
  $region25: #{_forward_jit.1} parent=0 // pred_fallthru
    _

</llo_original>
